<compile_context>
chip_gen: v5e
topology: v5e:2x2
jax: 0.10.0
libtpu: 0.0.40
codegen_flags: <defaults>
</compile_context>

<pallas_src>
import jax
import jax.numpy as jnp
from jax import lax
from jax.experimental import pallas as pl
from jax.experimental.pallas import tpu as pltpu


def _round_up(x, m):
    return ((x + m - 1) // m) * m


def _make_gap_conv1x1_kernel(tn, group):
    """Kernel over one (tn, C, HW) NCHW tile, reduced in `group`-row chunks."""
    n_full = tn // group
    rem = tn - n_full * group

    def kernel(x_ref, w_ref, b_ref, o_ref):
        # x_ref: (tn, C, HW) native dtype -- feature-map tile, HW on the lane axis
        # w_ref: (1, C)      f32          -- 1x1-conv weight with 1/(H*W) pre-folded
        # b_ref: (1,)        f32 in SMEM  -- conv bias scalar
        # o_ref: (tn, 1)     f32          -- per-image scalar
        w = w_ref[...]          # hoisted: avoid re-broadcasting per chunk
        b = b_ref[0]

        def process(start, rows):
            x = x_ref[pl.ds(start, rows)]                        # (rows, C, HW)
            # GAP*HW: XLU lane reduce over HW with f32 accumulation (cast fused into
            # the chunked reduce -> no tile-sized f32 temp in VMEM).
            pooled = jnp.sum(x, axis=-1, dtype=jnp.float32)      # (rows, C)
            # 1x1 conv: elementwise * w, lane reduce over C.
            y = jnp.sum(pooled * w, axis=-1, keepdims=True)      # (rows, 1)
            o_ref[pl.ds(start, rows), :] = y + b

        if n_full > 0:
            def body(i, carry):
                process(pl.multiple_of(i * group, group), group)
                return carry
            lax.fori_loop(0, n_full, body, 0, unroll=n_full <= 8)
        if rem > 0:
            process(n_full * group, rem)     # static epilogue for a ragged tail

    return kernel


def pretrained_net_head(x_nchw, conv_w, conv_b):
    """Fused AdaptiveAvgPool2d(1) + Conv2d(C, 1, 1) + flatten, NCHW in, no transpose.

    x_nchw : (N, C, H, W) feature map produced by the backbone (native dtype).
    conv_w : (1, C, 1, 1) conv weight.
    conv_b : (1,)         conv bias.
    returns: (N,) float32.
    """
    N, C, H, W = x_nchw.shape
    HW = H * W

    # Free view -- no HBM traffic, no transpose. HW lands on the lane axis.
    x3 = x_nchw.reshape(N, C, HW)

    # Fold the 1/(H*W) of AdaptiveAvgPool2d(1) into the 1x1-conv weight (f32).
    w2 = conv_w.reshape(1, C).astype(jnp.float32) / jnp.float32(HW)
    b1 = conv_b.reshape(1).astype(jnp.float32)

    elt = x3.dtype.itemsize
    c_pad = _round_up(C, 8)
    hw_pad = _round_up(HW, 128)
    img_vmem = c_pad * hw_pad * elt          # padded VMEM bytes of one image's (C, HW)
    img_hbm = C * HW * elt                   # unpadded HBM bytes of one image

    # Per-generation VMEM plan: query the chip (128 MiB on v5e/v6e, 64 MiB on v7x).
    try:
        vmem_cap = int(pltpu.get_tpu_info().vmem_capacity_bytes)
    except Exception:
        vmem_cap = 64 << 20                  # conservative fallback (v7x per-TC VMEM)
    input_budget = int(0.65 * vmem_cap)      # double-buffered input budget w/ headroom

    # ---- pick the batch tile tn ----
    max_tn = max(1, input_budget // (2 * img_vmem))
    tn = min(max_tn, N)
    if N >= 16:
        tn = min(tn, -(-N // 2))             # >= 2 grid steps: both v7x TCs get work
    if tn < N:
        tn = max(8, (tn // 8) * 8)           # keep (tn, 1) output blocks 8-aligned
        lo = max(8, tn // 2)
        for cand in range(tn, lo - 1, -8):   # prefer tn | N (no ragged masked step)
            if N % cand == 0:
                tn = cand
                break
    grid = (pl.cdiv(N, tn),)

    # ---- in-kernel reduction chunk size (bounds the f32 working set to ~8 MiB) ----
    group = max(1, (8 << 20) // (c_pad * hw_pad * 4))
    if group >= 8:
        group = (group // 8) * 8
    group = min(group, tn)

    # ---- explicit scoped-VMEM limit sized to the actual footprint ----
    footprint = (2 * tn * img_vmem                               # double-buffered input
                 + group * c_pad * hw_pad * 4                    # f32 chunk working set
                 + 2 * 8 * _round_up(C, 128) * 4                 # weight buffers
                 + 2 * _round_up(tn, 8) * 128 * 4)               # output buffers
    vmem_limit = int(min(0.95 * vmem_cap, footprint + (8 << 20)))
    # TODO(synk): if a single 8-image tile ever exceeds physical VMEM (gigantic early
    # feature maps) the HW axis would also need tiling; never the case for ResNet heads.

    out = pl.pallas_call(
        _make_gap_conv1x1_kernel(tn, group),
        out_shape=jax.ShapeDtypeStruct((N, 1), jnp.float32),
        grid=grid,
        in_specs=[
            # Pipelined NCHW feature-map tiles; last two dims are full extents (C, HW).
            pl.BlockSpec((tn, C, HW), lambda i: (i, 0, 0)),
            # Weight: tiny, resident, same block every step.
            pl.BlockSpec((1, C), lambda i: (0, 0)),
            # Bias scalar lives in SMEM (no VMEM tile / DMA wasted on a (1,1) operand).
            pl.BlockSpec(memory_space=pltpu.MemorySpace.SMEM),
        ],
        out_specs=pl.BlockSpec((tn, 1), lambda i: (i, 0)),
        compiler_params=pltpu.CompilerParams(
            dimension_semantics=(pltpu.PARALLEL,),   # batch tiles split across v7x TCs
            vmem_limit_bytes=vmem_limit,
        ),
        cost_estimate=pl.CostEstimate(
            flops=2 * N * HW * C,
            transcendentals=0,
            bytes_accessed=N * img_hbm + C * 4 + N * 4 + 4,
        ),
    )(x3, w2, b1)

    return out.reshape(-1)   # == .flatten() -> (N,)


if __name__ == "__main__":
    # Small, deterministic shapes: N=2 images, C=128 feature channels, 8x8 spatial map.
    N, C, H, W = 2, 128, 8, 8

    key = jax.random.PRNGKey(0)
    kx, kw, kb = jax.random.split(key, 3)

    x = jax.random.normal(kx, (N, C, H, W), dtype=jnp.float32)
    # Deterministic Conv2d(C, 1, kernel_size=1) parameters (synthetic, not a checkpoint).
    bound = 1.0 / jnp.sqrt(jnp.float32(C))
    conv_w = jax.random.uniform(kw, (1, C, 1, 1), minval=-bound, maxval=bound,
                                dtype=jnp.float32)
    conv_b = jax.random.uniform(kb, (1,), minval=-bound, maxval=bound,
                                dtype=jnp.float32)

    out = jax.block_until_ready(pretrained_net_head(x, conv_w, conv_b))

    # Pure-JAX reference of the same head.
    ref = (x.mean(axis=(2, 3)) * conv_w.reshape(1, C)).sum(axis=-1) + conv_b[0]

    assert out.shape == (N,)
    assert jnp.allclose(out, ref, atol=1e-5, rtol=1e-5), (out, ref)
    print("KERNEL_OK")
</pallas_src>

<mosaic_0001>
module attributes {stable_mosaic.version = 11 : i64} {
  func.func @kernel(%arg0: i32, %arg1: memref<2x128x64xf32, #tpu.memory_space<vmem>>, %arg2: memref<1x128xf32, #tpu.memory_space<vmem>>, %arg3: memref<1xf32, #tpu.memory_space<smem>>, %arg4: memref<2x1xf32, #tpu.memory_space<vmem>>) attributes {dimension_semantics = [#tpu.dimension_semantics<parallel>], iteration_bounds = array<i64: 1>, scalar_prefetch = 0 : i64, scratch_operands = 0 : i64, tpu.core_type = #tpu.core_type<tc>, window_params = [{transform_indices = @transform_0, window_bounds = array<i64: 2, 128, 64>}, {pipeline_mode = #tpu.pipeline_mode<synchronous>, transform_indices = @transform_1, window_bounds = array<i64: 1, 128>}, {transform_indices = @transform_2, window_bounds = array<i64: 1>}, {transform_indices = @transform_3, window_bounds = array<i64: 2, 1>}]} {
    %c0 = arith.constant 0 : index
    %c0_0 = arith.constant 0 : index
    %0 = vector.load %arg2[%c0, %c0_0] : memref<1x128xf32, #tpu.memory_space<vmem>>, vector<1x128xf32>
    %c0_1 = arith.constant 0 : index
    %1 = memref.load %arg3[%c0_1] : memref<1xf32, #tpu.memory_space<smem>>
    %c0_i32 = arith.constant 0 : i32
    %c2_i32 = arith.constant 2 : i32
    %2 = arith.muli %c0_i32, %c2_i32 : i32
    %3 = tpu.assume_multiple %2, 2 : i32
    %4 = arith.index_cast %3 : i32 to index
    %c0_2 = arith.constant 0 : index
    %c0_3 = arith.constant 0 : index
    %5 = vector.load %arg1[%4, %c0_2, %c0_3] : memref<2x128x64xf32, #tpu.memory_space<vmem>>, vector<2x128x64xf32>
    %cst = arith.constant dense<0.000000e+00> : vector<2x128xf32>
    %6 = vector.multi_reduction <add>, %5, %cst [2] : vector<2x128x64xf32> to vector<2x128xf32>
    %7 = vector.broadcast %0 : vector<1x128xf32> to vector<2x128xf32>
    %8 = arith.mulf %6, %7 : vector<2x128xf32>
    %cst_4 = arith.constant dense<0.000000e+00> : vector<2xf32>
    %9 = vector.multi_reduction <add>, %8, %cst_4 [1] : vector<2x128xf32> to vector<2xf32>
    %10 = vector.shape_cast %9 : vector<2xf32> to vector<2x1xf32>
    %11 = vector.broadcast %1 : f32 to vector<2x1xf32>
    %12 = arith.addf %10, %11 : vector<2x1xf32>
    %13 = arith.index_cast %3 : i32 to index
    %c0_5 = arith.constant 0 : index
    %14 = vector.load %arg4[%13, %c0_5] : memref<2x1xf32, #tpu.memory_space<vmem>>, vector<2x1xf32>
    tpu.vector_store %arg4[%13, %c0_5], %12 {strides = array<i32>} : memref<2x1xf32, #tpu.memory_space<vmem>>, vector<2x1xf32>,
    %c1_i32 = arith.constant 1 : i32
    return
  }
  func.func @transform_0(%arg0: i32) -> (i32, i32, i32) {
    %c0_i32 = arith.constant 0 : i32
    %c0_i32_0 = arith.constant 0 : i32
    %c0_i32_1 = arith.constant 0 : i32
    return %arg0, %c0_i32, %c0_i32_0 : i32, i32, i32
  }
  func.func @transform_1(%arg0: i32) -> (i32, i32) {
    %c0_i32 = arith.constant 0 : i32
    %c0_i32_0 = arith.constant 0 : i32
    %c0_i32_1 = arith.constant 0 : i32
    return %c0_i32, %c0_i32_0 : i32, i32
  }
  func.func @transform_2(%arg0: i32) -> i32 {
    %c0_i32 = arith.constant 0 : i32
    %c0_i32_0 = arith.constant 0 : i32
    return %c0_i32 : i32
  }
  func.func @transform_3(%arg0: i32) -> (i32, i32) {
    %c0_i32 = arith.constant 0 : i32
    %c0_i32_0 = arith.constant 0 : i32
    return %arg0, %c0_i32 : i32, i32
  }
}

</mosaic_0001>

<llo_original>
// kernel: tpu_custom_call.1
$region0: #{tpu_custom_call.1}
  #allocation0 [shape = 'u32[]', space=smem, size = 0x4, offset = 0x4, fixed_abs, tag = 'smem constant byte address 0x4 - core index']
  #allocation1 [shape = 'u32[72,128]{1,0:T(1,128)}', space=vmem, size = 0x9000, scoped, tag = 'internal scratch']
  #allocation2 [shape = 'f32[1]{0:T(128)S(6)}', space=smem, size = 0x200, scoped, tag = 'scoped memory for tpu_custom_call.1']
  %s0 = inlined_call_operand.vmem [shape: f32[2,128,64], index: 0, kind: input, shape index: {}]
  %s1 = inlined_call_operand.vmem [shape: f32[1,128], index: 1, kind: input, shape index: {}]
  %s2 = inlined_call_operand.<no memory space> [shape: f32[1], index: 2, kind: input, shape index: {}]
  %s3 = inlined_call_operand.vmem [shape: f32[2,1], index: 3, kind: output, shape index: {}]
  %s4 = sld [smem:[#allocation0]]
  $region22: #{tpu_custom_call.1} parent=0
    _
  %s6 = ssub.s32 1, %s4
  %s7 = scalar_select 0, %s6, %s4
  %8 = sst [smem:[#allocation2]] %s2
  // Predicated region
  $region2: #{tpu_custom_call.1} parent=0 // pred_check
    _
  $region3: #{tpu_custom_call.1} parent=0 // pred_check_branch
    %10 = sbr.rel (0) target = $region5
  $region4: #{tpu_custom_call.1} parent=0 // pred_region
    _
  $region5: #{tpu_custom_call.1} parent=0 // pred_fallthru
    _
  // Predicated region
  $region6: #{tpu_custom_call.1} parent=0 // pred_check
    _
  $region7: #{tpu_custom_call.1} parent=0 // pred_check_branch
    %12 = sbr.rel (0) target = $region9
  $region8: #{tpu_custom_call.1} parent=0 // pred_region
    _
  $region9: #{tpu_custom_call.1} parent=0 // pred_fallthru
    _
  // Predicated region
  $region10: #{tpu_custom_call.1} parent=0 // pred_check
    _
  $region11: #{tpu_custom_call.1} parent=0 // pred_check_branch
    %14 = sbr.rel (0) target = $region13
  $region12: #{tpu_custom_call.1} parent=0 // pred_region
    _
  $region13: #{tpu_custom_call.1} parent=0 // pred_fallthru
    _
  %v15 = vld [vmem:[%s1] sm:$0x1]
  %s16 = sld [smem:[#allocation2]]
  %s17 = smul.u32 0, 128
  %s18 = scalar_lea.vmem %s0, %s17
  %v19 = vld [vmem:[%s18] sm:$0xff]
  %v20 = vld [vmem:[%s18 + $0x8] sm:$0xff]
  %v21 = vld [vmem:[%s18 + $0x10] sm:$0xff]
  %v22 = vld [vmem:[%s18 + $0x18] sm:$0xff]
  %v23 = vld [vmem:[%s18 + $0x20] sm:$0xff]
  %v24 = vld [vmem:[%s18 + $0x28] sm:$0xff]
  %v25 = vld [vmem:[%s18 + $0x30] sm:$0xff]
  %v26 = vld [vmem:[%s18 + $0x38] sm:$0xff]
  %v27 = vld [vmem:[%s18 + $0x40] sm:$0xff]
  %v28 = vld [vmem:[%s18 + $0x48] sm:$0xff]
  %v29 = vld [vmem:[%s18 + $0x50] sm:$0xff]
  %v30 = vld [vmem:[%s18 + $0x58] sm:$0xff]
  %v31 = vld [vmem:[%s18 + $0x60] sm:$0xff]
  %v32 = vld [vmem:[%s18 + $0x68] sm:$0xff]
  %v33 = vld [vmem:[%s18 + $0x70] sm:$0xff]
  %v34 = vld [vmem:[%s18 + $0x78] sm:$0xff]
  %v35 = vld [vmem:[%s18 + $0x80] sm:$0xff]
  %v36 = vld [vmem:[%s18 + $0x88] sm:$0xff]
  %v37 = vld [vmem:[%s18 + $0x90] sm:$0xff]
  %v38 = vld [vmem:[%s18 + $0x98] sm:$0xff]
  %v39 = vld [vmem:[%s18 + $0xa0] sm:$0xff]
  %v40 = vld [vmem:[%s18 + $0xa8] sm:$0xff]
  %v41 = vld [vmem:[%s18 + $0xb0] sm:$0xff]
  %v42 = vld [vmem:[%s18 + $0xb8] sm:$0xff]
  %v43 = vld [vmem:[%s18 + $0xc0] sm:$0xff]
  %v44 = vld [vmem:[%s18 + $0xc8] sm:$0xff]
  %v45 = vld [vmem:[%s18 + $0xd0] sm:$0xff]
  %v46 = vld [vmem:[%s18 + $0xd8] sm:$0xff]
  %v47 = vld [vmem:[%s18 + $0xe0] sm:$0xff]
  %v48 = vld [vmem:[%s18 + $0xe8] sm:$0xff]
  %v49 = vld [vmem:[%s18 + $0xf0] sm:$0xff]
  %v50 = vld [vmem:[%s18 + $0xf8] sm:$0xff]
  %vm51 = vcmask 523264
  %v52 = vsel %vm51, %v19, 0.0
  %53 = vadd.xlane.f32.xlu0 %v52
  %v54 = vpop.xlane.xlu0 %53
  %v55 = vsel %vm51, %v20, 0.0
  %56 = vadd.xlane.f32.xlu0 %v55
  %v57 = vpop.xlane.xlu0 %56
  %v58 = vsel %vm51, %v21, 0.0
  %59 = vadd.xlane.f32.xlu0 %v58
  %v60 = vpop.xlane.xlu0 %59
  %v61 = vsel %vm51, %v22, 0.0
  %62 = vadd.xlane.f32.xlu0 %v61
  %v63 = vpop.xlane.xlu0 %62
  %v64 = vsel %vm51, %v23, 0.0
  %65 = vadd.xlane.f32.xlu0 %v64
  %v66 = vpop.xlane.xlu0 %65
  %v67 = vsel %vm51, %v24, 0.0
  %68 = vadd.xlane.f32.xlu0 %v67
  %v69 = vpop.xlane.xlu0 %68
  %v70 = vsel %vm51, %v25, 0.0
  %71 = vadd.xlane.f32.xlu0 %v70
  %v72 = vpop.xlane.xlu0 %71
  %v73 = vsel %vm51, %v26, 0.0
  %74 = vadd.xlane.f32.xlu0 %v73
  %v75 = vpop.xlane.xlu0 %74
  %v76 = vsel %vm51, %v27, 0.0
  %77 = vadd.xlane.f32.xlu0 %v76
  %v78 = vpop.xlane.xlu0 %77
  %v79 = vsel %vm51, %v28, 0.0
  %80 = vadd.xlane.f32.xlu0 %v79
  %v81 = vpop.xlane.xlu0 %80
  %v82 = vsel %vm51, %v29, 0.0
  %83 = vadd.xlane.f32.xlu0 %v82
  %v84 = vpop.xlane.xlu0 %83
  %v85 = vsel %vm51, %v30, 0.0
  %86 = vadd.xlane.f32.xlu0 %v85
  %v87 = vpop.xlane.xlu0 %86
  %v88 = vsel %vm51, %v31, 0.0
  %89 = vadd.xlane.f32.xlu0 %v88
  %v90 = vpop.xlane.xlu0 %89
  %v91 = vsel %vm51, %v32, 0.0
  %92 = vadd.xlane.f32.xlu0 %v91
  %v93 = vpop.xlane.xlu0 %92
  %v94 = vsel %vm51, %v33, 0.0
  %95 = vadd.xlane.f32.xlu0 %v94
  %v96 = vpop.xlane.xlu0 %95
  %v97 = vsel %vm51, %v34, 0.0
  %98 = vadd.xlane.f32.xlu0 %v97
  %v99 = vpop.xlane.xlu0 %98
  %v100 = vsel %vm51, %v35, 0.0
  %101 = vadd.xlane.f32.xlu0 %v100
  %v102 = vpop.xlane.xlu0 %101
  %v103 = vsel %vm51, %v36, 0.0
  %104 = vadd.xlane.f32.xlu0 %v103
  %v105 = vpop.xlane.xlu0 %104
  %v106 = vsel %vm51, %v37, 0.0
  %107 = vadd.xlane.f32.xlu0 %v106
  %v108 = vpop.xlane.xlu0 %107
  %v109 = vsel %vm51, %v38, 0.0
  %110 = vadd.xlane.f32.xlu0 %v109
  %v111 = vpop.xlane.xlu0 %110
  %v112 = vsel %vm51, %v39, 0.0
  %113 = vadd.xlane.f32.xlu0 %v112
  %v114 = vpop.xlane.xlu0 %113
  %v115 = vsel %vm51, %v40, 0.0
  %116 = vadd.xlane.f32.xlu0 %v115
  %v117 = vpop.xlane.xlu0 %116
  %v118 = vsel %vm51, %v41, 0.0
  %119 = vadd.xlane.f32.xlu0 %v118
  %v120 = vpop.xlane.xlu0 %119
  %v121 = vsel %vm51, %v42, 0.0
  %122 = vadd.xlane.f32.xlu0 %v121
  %v123 = vpop.xlane.xlu0 %122
  %v124 = vsel %vm51, %v43, 0.0
  %125 = vadd.xlane.f32.xlu0 %v124
  %v126 = vpop.xlane.xlu0 %125
  %v127 = vsel %vm51, %v44, 0.0
  %128 = vadd.xlane.f32.xlu0 %v127
  %v129 = vpop.xlane.xlu0 %128
  %v130 = vsel %vm51, %v45, 0.0
  %131 = vadd.xlane.f32.xlu0 %v130
  %v132 = vpop.xlane.xlu0 %131
  %v133 = vsel %vm51, %v46, 0.0
  %134 = vadd.xlane.f32.xlu0 %v133
  %v135 = vpop.xlane.xlu0 %134
  %v136 = vsel %vm51, %v47, 0.0
  %137 = vadd.xlane.f32.xlu0 %v136
  %v138 = vpop.xlane.xlu0 %137
  %v139 = vsel %vm51, %v48, 0.0
  %140 = vadd.xlane.f32.xlu0 %v139
  %v141 = vpop.xlane.xlu0 %140
  %v142 = vsel %vm51, %v49, 0.0
  %143 = vadd.xlane.f32.xlu0 %v142
  %v144 = vpop.xlane.xlu0 %143
  %v145 = vsel %vm51, %v50, 0.0
  %146 = vadd.xlane.f32.xlu0 %v145
  %v147 = vpop.xlane.xlu0 %146
  %v149 = vperm.slane %v15, 0
  %v150 = vlaneseq
  %v151 = vshrl.u32 %v150, 7
  %153 = vset.pattern.permute.xlu0 %v151
  %154 = vperm.xlu0 %153, %v149
  %v155 = vpop.permute.xlu0 %154
  %v156 = vlaneseq
  %v157 = vshrl.u32 %v156, 7
  %v158 = vadd.s32 %v157, 8
  %159 = vset.pattern.permute.xlu0 %v158
  %160 = vperm.xlu0 %159, %v149
  %v161 = vpop.permute.xlu0 %160
  %v162 = vlaneseq
  %v163 = vshrl.u32 %v162, 7
  %v164 = vadd.s32 %v163, 16
  %165 = vset.pattern.permute.xlu0 %v164
  %166 = vperm.xlu0 %165, %v149
  %v167 = vpop.permute.xlu0 %166
  %v168 = vlaneseq
  %v169 = vshrl.u32 %v168, 7
  %v170 = vadd.s32 %v169, 24
  %171 = vset.pattern.permute.xlu0 %v170
  %172 = vperm.xlu0 %171, %v149
  %v173 = vpop.permute.xlu0 %172
  %v174 = vlaneseq
  %v175 = vshrl.u32 %v174, 7
  %v176 = vadd.s32 %v175, 32
  %177 = vset.pattern.permute.xlu0 %v176
  %178 = vperm.xlu0 %177, %v149
  %v179 = vpop.permute.xlu0 %178
  %v180 = vlaneseq
  %v181 = vshrl.u32 %v180, 7
  %v182 = vadd.s32 %v181, 40
  %183 = vset.pattern.permute.xlu0 %v182
  %184 = vperm.xlu0 %183, %v149
  %v185 = vpop.permute.xlu0 %184
  %v186 = vlaneseq
  %v187 = vshrl.u32 %v186, 7
  %v188 = vadd.s32 %v187, 48
  %189 = vset.pattern.permute.xlu0 %v188
  %190 = vperm.xlu0 %189, %v149
  %v191 = vpop.permute.xlu0 %190
  %v192 = vlaneseq
  %v193 = vshrl.u32 %v192, 7
  %v194 = vadd.s32 %v193, 56
  %195 = vset.pattern.permute.xlu0 %v194
  %196 = vperm.xlu0 %195, %v149
  %v197 = vpop.permute.xlu0 %196
  %v198 = vlaneseq
  %v199 = vshrl.u32 %v198, 7
  %v200 = vadd.s32 %v199, 64
  %201 = vset.pattern.permute.xlu0 %v200
  %202 = vperm.xlu0 %201, %v149
  %v203 = vpop.permute.xlu0 %202
  %v204 = vlaneseq
  %v205 = vshrl.u32 %v204, 7
  %v206 = vadd.s32 %v205, 72
  %207 = vset.pattern.permute.xlu0 %v206
  %208 = vperm.xlu0 %207, %v149
  %v209 = vpop.permute.xlu0 %208
  %v210 = vlaneseq
  %v211 = vshrl.u32 %v210, 7
  %v212 = vadd.s32 %v211, 80
  %213 = vset.pattern.permute.xlu0 %v212
  %214 = vperm.xlu0 %213, %v149
  %v215 = vpop.permute.xlu0 %214
  %v216 = vlaneseq
  %v217 = vshrl.u32 %v216, 7
  %v218 = vadd.s32 %v217, 88
  %219 = vset.pattern.permute.xlu0 %v218
  %220 = vperm.xlu0 %219, %v149
  %v221 = vpop.permute.xlu0 %220
  %v222 = vlaneseq
  %v223 = vshrl.u32 %v222, 7
  %v224 = vadd.s32 %v223, 96
  %225 = vset.pattern.permute.xlu0 %v224
  %226 = vperm.xlu0 %225, %v149
  %v227 = vpop.permute.xlu0 %226
  %v228 = vlaneseq
  %v229 = vshrl.u32 %v228, 7
  %v230 = vadd.s32 %v229, 104
  %231 = vset.pattern.permute.xlu0 %v230
  %232 = vperm.xlu0 %231, %v149
  %v233 = vpop.permute.xlu0 %232
  %v234 = vlaneseq
  %v235 = vshrl.u32 %v234, 7
  %v236 = vadd.s32 %v235, 112
  %237 = vset.pattern.permute.xlu0 %v236
  %238 = vperm.xlu0 %237, %v149
  %v239 = vpop.permute.xlu0 %238
  %v240 = vlaneseq
  %v241 = vshrl.u32 %v240, 7
  %v242 = vadd.s32 %v241, 120
  %243 = vset.pattern.permute.xlu0 %v242
  %244 = vperm.xlu0 %243, %v149
  %v245 = vpop.permute.xlu0 %244
  %v262 = vmul.f32 %v54, %v155
  %v263 = vmul.f32 %v57, %v161
  %v264 = vmul.f32 %v60, %v167
  %v265 = vmul.f32 %v63, %v173
  %v266 = vmul.f32 %v66, %v179
  %v267 = vmul.f32 %v69, %v185
  %v268 = vmul.f32 %v72, %v191
  %v269 = vmul.f32 %v75, %v197
  %v270 = vmul.f32 %v78, %v203
  %v271 = vmul.f32 %v81, %v209
  %v272 = vmul.f32 %v84, %v215
  %v273 = vmul.f32 %v87, %v221
  %v274 = vmul.f32 %v90, %v227
  %v275 = vmul.f32 %v93, %v233
  %v276 = vmul.f32 %v96, %v239
  %v277 = vmul.f32 %v99, %v245
  %v278 = vmul.f32 %v102, %v155
  %v279 = vmul.f32 %v105, %v161
  %v280 = vmul.f32 %v108, %v167
  %v281 = vmul.f32 %v111, %v173
  %v282 = vmul.f32 %v114, %v179
  %v283 = vmul.f32 %v117, %v185
  %v284 = vmul.f32 %v120, %v191
  %v285 = vmul.f32 %v123, %v197
  %v286 = vmul.f32 %v126, %v203
  %v287 = vmul.f32 %v129, %v209
  %v288 = vmul.f32 %v132, %v215
  %v289 = vmul.f32 %v135, %v221
  %v290 = vmul.f32 %v138, %v227
  %v291 = vmul.f32 %v141, %v233
  %v292 = vmul.f32 %v144, %v239
  %v293 = vmul.f32 %v147, %v245
  %326 = vset.pattern.permute.xlu0 0
  %327 = vperm.xlu0 %326, %v262
  %v328 = vpop.permute.xlu0 %327
  %329 = vset.pattern.permute.xlu0 0
  %330 = vperm.xlu0 %329, %v263
  %v331 = vpop.permute.xlu0 %330
  %332 = vset.pattern.permute.xlu0 0
  %333 = vperm.xlu0 %332, %v264
  %v334 = vpop.permute.xlu0 %333
  %335 = vset.pattern.permute.xlu0 0
  %336 = vperm.xlu0 %335, %v265
  %v337 = vpop.permute.xlu0 %336
  %338 = vset.pattern.permute.xlu0 0
  %339 = vperm.xlu0 %338, %v266
  %v340 = vpop.permute.xlu0 %339
  %341 = vset.pattern.permute.xlu0 0
  %342 = vperm.xlu0 %341, %v267
  %v343 = vpop.permute.xlu0 %342
  %344 = vset.pattern.permute.xlu0 0
  %345 = vperm.xlu0 %344, %v268
  %v346 = vpop.permute.xlu0 %345
  %347 = vset.pattern.permute.xlu0 0
  %348 = vperm.xlu0 %347, %v269
  %v349 = vpop.permute.xlu0 %348
  %350 = vset.pattern.permute.xlu0 0
  %351 = vperm.xlu0 %350, %v270
  %v352 = vpop.permute.xlu0 %351
  %353 = vset.pattern.permute.xlu0 0
  %354 = vperm.xlu0 %353, %v271
  %v355 = vpop.permute.xlu0 %354
  %356 = vset.pattern.permute.xlu0 0
  %357 = vperm.xlu0 %356, %v272
  %v358 = vpop.permute.xlu0 %357
  %359 = vset.pattern.permute.xlu0 0
  %360 = vperm.xlu0 %359, %v273
  %v361 = vpop.permute.xlu0 %360
  %362 = vset.pattern.permute.xlu0 0
  %363 = vperm.xlu0 %362, %v274
  %v364 = vpop.permute.xlu0 %363
  %365 = vset.pattern.permute.xlu0 0
  %366 = vperm.xlu0 %365, %v275
  %v367 = vpop.permute.xlu0 %366
  %368 = vset.pattern.permute.xlu0 0
  %369 = vperm.xlu0 %368, %v276
  %v370 = vpop.permute.xlu0 %369
  %371 = vset.pattern.permute.xlu0 0
  %372 = vperm.xlu0 %371, %v277
  %v373 = vpop.permute.xlu0 %372
  %374 = vset.pattern.permute.xlu0 0
  %375 = vperm.xlu0 %374, %v278
  %v376 = vpop.permute.xlu0 %375
  %377 = vset.pattern.permute.xlu0 0
  %378 = vperm.xlu0 %377, %v279
  %v379 = vpop.permute.xlu0 %378
  %380 = vset.pattern.permute.xlu0 0
  %381 = vperm.xlu0 %380, %v280
  %v382 = vpop.permute.xlu0 %381
  %383 = vset.pattern.permute.xlu0 0
  %384 = vperm.xlu0 %383, %v281
  %v385 = vpop.permute.xlu0 %384
  %386 = vset.pattern.permute.xlu0 0
  %387 = vperm.xlu0 %386, %v282
  %v388 = vpop.permute.xlu0 %387
  %389 = vset.pattern.permute.xlu0 0
  %390 = vperm.xlu0 %389, %v283
  %v391 = vpop.permute.xlu0 %390
  %392 = vset.pattern.permute.xlu0 0
  %393 = vperm.xlu0 %392, %v284
  %v394 = vpop.permute.xlu0 %393
  %395 = vset.pattern.permute.xlu0 0
  %396 = vperm.xlu0 %395, %v285
  %v397 = vpop.permute.xlu0 %396
  %398 = vset.pattern.permute.xlu0 0
  %399 = vperm.xlu0 %398, %v286
  %v400 = vpop.permute.xlu0 %399
  %401 = vset.pattern.permute.xlu0 0
  %402 = vperm.xlu0 %401, %v287
  %v403 = vpop.permute.xlu0 %402
  %404 = vset.pattern.permute.xlu0 0
  %405 = vperm.xlu0 %404, %v288
  %v406 = vpop.permute.xlu0 %405
  %407 = vset.pattern.permute.xlu0 0
  %408 = vperm.xlu0 %407, %v289
  %v409 = vpop.permute.xlu0 %408
  %410 = vset.pattern.permute.xlu0 0
  %411 = vperm.xlu0 %410, %v290
  %v412 = vpop.permute.xlu0 %411
  %413 = vset.pattern.permute.xlu0 0
  %414 = vperm.xlu0 %413, %v291
  %v415 = vpop.permute.xlu0 %414
  %416 = vset.pattern.permute.xlu0 0
  %417 = vperm.xlu0 %416, %v292
  %v418 = vpop.permute.xlu0 %417
  %419 = vset.pattern.permute.xlu0 0
  %420 = vperm.xlu0 %419, %v293
  %v421 = vpop.permute.xlu0 %420
  %v422 = vlaneseq
  %v423 = vand.u32 %v422, 127
  %v424 = vperm.slane %v328, %v423
  %v425 = vadd.s32 %v423, 4294967288
  %v426 = vperm.slane %v331, %v425
  %vm427 = vcmask 130112
  %v428 = vsel %vm427, %v426, %v424
  %v429 = vadd.s32 %v423, 4294967280
  %v430 = vperm.slane %v334, %v429
  %vm431 = vcmask 195712
  %v432 = vsel %vm431, %v430, %v428
  %v433 = vadd.s32 %v423, 4294967272
  %v434 = vperm.slane %v337, %v433
  %vm435 = vcmask 261312
  %v436 = vsel %vm435, %v434, %v432
  %v437 = vadd.s32 %v423, 4294967264
  %v438 = vperm.slane %v340, %v437
  %vm439 = vcmask 326912
  %v440 = vsel %vm439, %v438, %v436
  %v441 = vadd.s32 %v423, 4294967256
  %v442 = vperm.slane %v343, %v441
  %vm443 = vcmask 392512
  %v444 = vsel %vm443, %v442, %v440
  %v445 = vadd.s32 %v423, 4294967248
  %v446 = vperm.slane %v346, %v445
  %vm447 = vcmask 458112
  %v448 = vsel %vm447, %v446, %v444
  %v449 = vadd.s32 %v423, 4294967240
  %v450 = vperm.slane %v349, %v449
  %vm451 = vcmask 523712
  %v452 = vsel %vm451, %v450, %v448
  %v453 = vadd.s32 %v423, 4294967232
  %v454 = vperm.slane %v352, %v453
  %vm455 = vcmask 589312
  %v456 = vsel %vm455, %v454, %v452
  %v457 = vadd.s32 %v423, 4294967224
  %v458 = vperm.slane %v355, %v457
  %vm459 = vcmask 654912
  %v460 = vsel %vm459, %v458, %v456
  %v461 = vadd.s32 %v423, 4294967216
  %v462 = vperm.slane %v358, %v461
  %vm463 = vcmask 720512
  %v464 = vsel %vm463, %v462, %v460
  %v465 = vadd.s32 %v423, 4294967208
  %v466 = vperm.slane %v361, %v465
  %vm467 = vcmask 786112
  %v468 = vsel %vm467, %v466, %v464
  %v469 = vadd.s32 %v423, 4294967200
  %v470 = vperm.slane %v364, %v469
  %vm471 = vcmask 851712
  %v472 = vsel %vm471, %v470, %v468
  %v473 = vadd.s32 %v423, 4294967192
  %v474 = vperm.slane %v367, %v473
  %vm475 = vcmask 917312
  %v476 = vsel %vm475, %v474, %v472
  %v477 = vadd.s32 %v423, 4294967184
  %v478 = vperm.slane %v370, %v477
  %vm479 = vcmask 982912
  %v480 = vsel %vm479, %v478, %v476
  %v481 = vadd.s32 %v423, 4294967176
  %v482 = vperm.slane %v373, %v481
  %vm483 = vcmask 1048512
  %v484 = vsel %vm483, %v482, %v480
  %v485 = vperm.slane %v376, %v423
  %v486 = vperm.slane %v379, %v425
  %v487 = vsel %vm427, %v486, %v485
  %v488 = vperm.slane %v382, %v429
  %v489 = vsel %vm431, %v488, %v487
  %v490 = vperm.slane %v385, %v433
  %v491 = vsel %vm435, %v490, %v489
  %v492 = vperm.slane %v388, %v437
  %v493 = vsel %vm439, %v492, %v491
  %v494 = vperm.slane %v391, %v441
  %v495 = vsel %vm443, %v494, %v493
  %v496 = vperm.slane %v394, %v445
  %v497 = vsel %vm447, %v496, %v495
  %v498 = vperm.slane %v397, %v449
  %v499 = vsel %vm451, %v498, %v497
  %v500 = vperm.slane %v400, %v453
  %v501 = vsel %vm455, %v500, %v499
  %v502 = vperm.slane %v403, %v457
  %v503 = vsel %vm459, %v502, %v501
  %v504 = vperm.slane %v406, %v461
  %v505 = vsel %vm463, %v504, %v503
  %v506 = vperm.slane %v409, %v465
  %v507 = vsel %vm467, %v506, %v505
  %v508 = vperm.slane %v412, %v469
  %v509 = vsel %vm471, %v508, %v507
  %v510 = vperm.slane %v415, %v473
  %v511 = vsel %vm475, %v510, %v509
  %v512 = vperm.slane %v418, %v477
  %v513 = vsel %vm479, %v512, %v511
  %v514 = vperm.slane %v421, %v481
  %v515 = vsel %vm483, %v514, %v513
  %vm516 = vcmask 1041409
  %v517 = vsel %vm516, %v515, %v484
  %vm519 = vcmask 1041408
  %v520 = vsel %vm519, %v517, 0.0
  %521 = vadd.xlane.f32.xlu0 %v520
  %v522 = vpop.xlane.xlu0 %521
  %v523 = vstv %s16
  %v524 = vadd.f32 %v522, %v523
  %vm525 = vcmask 1024
  %526 = vst.msk [vmem:[%s3] sm:$0x3] %vm525, %v524
  // Predicated region
  $region14: #{tpu_custom_call.1} parent=0 // pred_check
    _
  $region15: #{tpu_custom_call.1} parent=0 // pred_check_branch
    %528 = sbr.rel (0) target = $region17
  $region16: #{tpu_custom_call.1} parent=0 // pred_region
    _
  $region17: #{tpu_custom_call.1} parent=0 // pred_fallthru
    _
  // Predicated region
  $region18: #{tpu_custom_call.1} parent=0 // pred_check
    _
  $region19: #{tpu_custom_call.1} parent=0 // pred_check_branch
    %530 = sbr.rel (0) target = $region21
  $region20: #{tpu_custom_call.1} parent=0 // pred_region
    _
  $region21: #{tpu_custom_call.1} parent=0 // pred_fallthru
    _

</llo_original>
